<compile_context>
chip_gen: v6e
topology: v6e:2x2x1
jax: 0.10.0
libtpu: 0.0.40
codegen_flags: <defaults>
</compile_context>

<pallas_src>
import functools
import math

import jax
import jax.numpy as jnp
from jax.experimental import pallas as pl
from jax.experimental.pallas import tpu as pltpu


def _fused_lstm_kernel(x_ref, hprev_ref, cprev_ref, w_ref, b_ref,
                       hc_out_ref, xh_ref, *, hidden, in0, kin_max):
    """One grid step == one LSTM layer. Gate order follows PyTorch: i, f, g, o.

    xh_ref is a persistent VMEM scratch of shape (B, kin_max + hidden) holding
    [layer_input (padded to kin_max) | h_prev(layer)].
    """
    l = pl.program_id(0)
    nl = pl.num_programs(0)
    batch = x_ref.shape[0]

    # --- assemble the concatenated [input | h_prev] tile -------------------
    @pl.when(l == 0)
    def _():
        # Layer-0 input is x, zero-padded up to kin_max columns.
        xh_ref[:, 0:in0] = x_ref[...]
        if in0 < kin_max:
            xh_ref[:, in0:kin_max] = jnp.zeros((batch, kin_max - in0),
                                               jnp.float32)

    # Recurrent h for this layer always sits at the fixed offset kin_max.
    xh_ref[:, kin_max:kin_max + hidden] = hprev_ref[0]

    # --- single fused gate matmul on the MXU -------------------------------
    gates = (jnp.dot(xh_ref[...], w_ref[0],
                     preferred_element_type=jnp.float32)
             + b_ref[0])                                   # (B, 4H)

    # --- full-tile activations + lane-mask select (i,f,o: sigmoid, g: tanh) -
    sig = jax.nn.sigmoid(gates)
    th = jnp.tanh(gates)
    lane = jax.lax.broadcasted_iota(jnp.int32, gates.shape, 1)
    g_lanes = (lane >= 2 * hidden) & (lane < 3 * hidden)
    act = jnp.where(g_lanes, th, sig)

    i_g = act[:, 0 * hidden:1 * hidden]
    f_g = act[:, 1 * hidden:2 * hidden]
    g_g = act[:, 2 * hidden:3 * hidden]
    o_g = act[:, 3 * hidden:4 * hidden]

    c_new = f_g * cprev_ref[0] + i_g * g_g
    h_new = o_g * jnp.tanh(c_new)

    # Packed (h | c) output: one wider store per layer.
    hc_out_ref[0] = jnp.concatenate([h_new, c_new], axis=-1)

    # --- feed h_new forward as next layer's input --------------------------
    @pl.when(l < nl - 1)
    def _():
        if kin_max > hidden:
            xh_ref[:, hidden:kin_max] = jnp.zeros((batch, kin_max - hidden),
                                                  jnp.float32)
        xh_ref[:, 0:hidden] = h_new


def lstm_forward_fused(x, h_prev, c_prev, w_stack, b_stack, *, kin_max):
    """All layers of a single-timestep LSTM in one pallas_call.

    x:        (B, num_inputs)
    h_prev:   (L, B, H)        c_prev: (L, B, H)
    w_stack:  (L, kin_max+H, 4H)   [W_ih^T ; zero pad ; W_hh^T] per layer
    b_stack:  (L, 1, 4H)           b_ih + b_hh per layer
    returns packed (L, B, 2H) = [h | c] per layer.
    """
    L, B, H = h_prev.shape
    in0 = x.shape[1]
    kmax = kin_max + H
    kernel = functools.partial(_fused_lstm_kernel,
                               hidden=H, in0=in0, kin_max=kin_max)

    hc = pl.pallas_call(
        kernel,
        out_shape=jax.ShapeDtypeStruct((L, B, 2 * H), jnp.float32),
        grid_spec=pltpu.PrefetchScalarGridSpec(
            num_scalar_prefetch=0,
            grid=(L,),
            in_specs=[
                pl.BlockSpec((B, in0), lambda l: (0, 0)),          # x (reused)
                pl.BlockSpec((1, B, H), lambda l: (l, 0, 0)),      # h_prev[l]
                pl.BlockSpec((1, B, H), lambda l: (l, 0, 0)),      # c_prev[l]
                pl.BlockSpec((1, kmax, 4 * H), lambda l: (l, 0, 0)),  # W[l]
                pl.BlockSpec((1, 1, 4 * H), lambda l: (l, 0, 0)),     # b[l]
            ],
            out_specs=pl.BlockSpec((1, B, 2 * H), lambda l: (l, 0, 0)),
            scratch_shapes=[pltpu.VMEM((B, kmax), jnp.float32)],   # [x|h] tile
        ),
        compiler_params=pltpu.CompilerParams(
            dimension_semantics=("arbitrary",)),   # layers are sequential
    )(x, h_prev, c_prev, w_stack, b_stack)
    return hc


class LSTMControllerPallas:
    """JAX/Pallas port of the NTM LSTMController (embedding=False path)."""

    def __init__(self, num_inputs, num_outputs, num_layers, key):
        self.num_inputs = num_inputs
        self.num_outputs = num_outputs
        self.num_layers = num_layers
        H = num_outputs
        self.kin_max = max(num_inputs, H)
        kmax = self.kin_max + H
        k = 1.0 / math.sqrt(H)  # PyTorch nn.LSTM default init: U(-k, k)

        w_stack = jnp.zeros((num_layers, kmax, 4 * H), jnp.float32)
        b_stack = jnp.zeros((num_layers, 1, 4 * H), jnp.float32)
        self.layers = []  # per-layer params kept for the pure-JAX reference
        for layer in range(num_layers):
            in_dim = num_inputs if layer == 0 else H
            key, k1, k2, k3, k4 = jax.random.split(key, 5)
            w_ih = jax.random.uniform(k1, (4 * H, in_dim), jnp.float32, -k, k)
            w_hh = jax.random.uniform(k2, (4 * H, H), jnp.float32, -k, k)
            b_ih = jax.random.uniform(k3, (4 * H,), jnp.float32, -k, k)
            b_hh = jax.random.uniform(k4, (4 * H,), jnp.float32, -k, k)
            wih_t = jnp.transpose(w_ih)   # (in_dim, 4H)
            whh_t = jnp.transpose(w_hh)   # (H, 4H)
            w_stack = w_stack.at[layer, 0:in_dim, :].set(wih_t)
            w_stack = w_stack.at[layer,
                                 self.kin_max:self.kin_max + H, :].set(whh_t)
            b_stack = b_stack.at[layer, 0, :].set(b_ih + b_hh)
            self.layers.append({"wih_t": wih_t, "whh_t": whh_t,
                                "b": (b_ih + b_hh).reshape(1, 4 * H)})
        self.w_stack = w_stack
        self.b_stack = b_stack

    def size(self):
        return (self.num_inputs, self.num_outputs)

    def create_new_state(self, batch_size):
        shape = (self.num_layers, batch_size, self.num_outputs)
        return (jnp.zeros(shape, jnp.float32), jnp.zeros(shape, jnp.float32))

    def forward(self, x, prev_state):
        """x: (batch, num_inputs). Returns (outp[-1], (h, c)) like the reference."""
        h_prev, c_prev = prev_state
        H = self.num_outputs
        hc = lstm_forward_fused(x, h_prev, c_prev, self.w_stack, self.b_stack,
                                kin_max=self.kin_max)
        h = hc[:, :, :H]
        c = hc[:, :, H:]
        # seq_len == 1, so outp[-1] == last layer's h for this step.
        return h[-1], (h, c)


def _reference_forward(model, x, prev_state):
    """Pure-jnp reference of the same math, for a correctness check."""
    h_prev, c_prev = prev_state
    inp = x
    hs, cs = [], []
    for l in range(model.num_layers):
        p = model.layers[l]
        H = model.num_outputs
        gates = inp @ p["wih_t"] + h_prev[l] @ p["whh_t"] + p["b"]
        i_g = jax.nn.sigmoid(gates[:, 0 * H:1 * H])
        f_g = jax.nn.sigmoid(gates[:, 1 * H:2 * H])
        g_g = jnp.tanh(gates[:, 2 * H:3 * H])
        o_g = jax.nn.sigmoid(gates[:, 3 * H:4 * H])
        c_new = f_g * c_prev[l] + i_g * g_g
        h_new = o_g * jnp.tanh(c_new)
        hs.append(h_new)
        cs.append(c_new)
        inp = h_new
    return inp, (jnp.stack(hs), jnp.stack(cs))


if __name__ == "__main__":
    batch = 8
    num_inputs = 32
    num_outputs = 32   # LSTM hidden size
    num_layers = 2

    key = jax.random.PRNGKey(0)
    key, pkey, xkey = jax.random.split(key, 3)

    model = LSTMControllerPallas(num_inputs, num_outputs, num_layers, pkey)

    x = jax.random.normal(xkey, (batch, num_inputs), dtype=jnp.float32)
    prev_state = model.create_new_state(batch)

    out, (h, c) = model.forward(x, prev_state)
    out = jax.block_until_ready(out)
    h = jax.block_until_ready(h)
    c = jax.block_until_ready(c)

    # sanity check against pure-JAX reference
    ref_out, (ref_h, ref_c) = _reference_forward(model, x, prev_state)
    assert out.shape == (batch, num_outputs)
    assert h.shape == (num_layers, batch, num_outputs)
    assert c.shape == (num_layers, batch, num_outputs)
    assert jnp.allclose(out, ref_out, rtol=1e-5, atol=1e-5)
    assert jnp.allclose(h, ref_h, rtol=1e-5, atol=1e-5)
    assert jnp.allclose(c, ref_c, rtol=1e-5, atol=1e-5)

    print("KERNEL_OK")
</pallas_src>

<mosaic_0001>
module attributes {stable_mosaic.version = 11 : i64} {
  func.func @_fused_lstm_kernel(%arg0: i32, %arg1: memref<8x32xf32, #tpu.memory_space<vmem>>, %arg2: memref<1x8x32xf32, #tpu.memory_space<vmem>>, %arg3: memref<1x8x32xf32, #tpu.memory_space<vmem>>, %arg4: memref<1x64x128xf32, #tpu.memory_space<vmem>>, %arg5: memref<1x1x128xf32, #tpu.memory_space<vmem>>, %arg6: memref<1x8x64xf32, #tpu.memory_space<vmem>>, %arg7: memref<8x64xf32, #tpu.memory_space<vmem>>) attributes {dimension_semantics = [#tpu.dimension_semantics<arbitrary>], iteration_bounds = array<i64: 2>, scalar_prefetch = 0 : i64, scratch_operands = 1 : i64, tpu.core_type = #tpu.core_type<tc>, window_params = [{pipeline_mode = #tpu.pipeline_mode<synchronous>, transform_indices = @transform_0, window_bounds = array<i64: 8, 32>}, {transform_indices = @transform_1, window_bounds = array<i64: 1, 8, 32>}, {transform_indices = @transform_2, window_bounds = array<i64: 1, 8, 32>}, {transform_indices = @transform_3, window_bounds = array<i64: 1, 64, 128>}, {transform_indices = @transform_4, window_bounds = array<i64: 1, 1, 128>}, {transform_indices = @transform_5, window_bounds = array<i64: 1, 8, 64>}]} {
    %c0_i32 = arith.constant 0 : i32
    %0 = arith.cmpi eq, %arg0, %c0_i32 : i32
    %1 = arith.extui %0 : i1 to i32
    %c0_i32_0 = arith.constant 0 : i32
    %2 = arith.cmpi ne, %1, %c0_i32_0 : i32
    scf.if %2 {
      %c0_20 = arith.constant 0 : index
      %c0_21 = arith.constant 0 : index
      %45 = vector.load %arg1[%c0_20, %c0_21] : memref<8x32xf32, #tpu.memory_space<vmem>>, vector<8x32xf32>
      %c0_22 = arith.constant 0 : index
      %c0_23 = arith.constant 0 : index
      %46 = vector.load %arg7[%c0_22, %c0_23] : memref<8x64xf32, #tpu.memory_space<vmem>>, vector<8x32xf32>
      tpu.vector_store %arg7[%c0_22, %c0_23], %45 {strides = array<i32>} : memref<8x64xf32, #tpu.memory_space<vmem>>, vector<8x32xf32>,
    } else {
    }
    %c0 = arith.constant 0 : index
    %c0_1 = arith.constant 0 : index
    %c0_2 = arith.constant 0 : index
    %3 = vector.load %arg2[%c0, %c0_1, %c0_2] : memref<1x8x32xf32, #tpu.memory_space<vmem>>, vector<1x8x32xf32>
    %4 = vector.shape_cast %3 : vector<1x8x32xf32> to vector<8x32xf32>
    %c0_3 = arith.constant 0 : index
    %c32 = arith.constant 32 : index
    %5 = vector.load %arg7[%c0_3, %c32] : memref<8x64xf32, #tpu.memory_space<vmem>>, vector<8x32xf32>
    tpu.vector_store %arg7[%c0_3, %c32], %4 {strides = array<i32>} : memref<8x64xf32, #tpu.memory_space<vmem>>, vector<8x32xf32>,
    %c0_4 = arith.constant 0 : index
    %c0_5 = arith.constant 0 : index
    %6 = vector.load %arg7[%c0_4, %c0_5] : memref<8x64xf32, #tpu.memory_space<vmem>>, vector<8x64xf32>
    %c0_6 = arith.constant 0 : index
    %c0_7 = arith.constant 0 : index
    %c0_8 = arith.constant 0 : index
    %7 = vector.load %arg4[%c0_6, %c0_7, %c0_8] : memref<1x64x128xf32, #tpu.memory_space<vmem>>, vector<1x64x128xf32>
    %8 = vector.shape_cast %7 : vector<1x64x128xf32> to vector<64x128xf32>
    %cst = arith.constant dense<0.000000e+00> : vector<8x128xf32>
    %9 = tpu.matmul %6, %8, %cst {dimension_numbers = #tpu.dot_dimension_numbers<[1], [0], [0], [1], [0, 0, 1, 1], [], []>} : vector<8x64xf32>, vector<64x128xf32>, vector<8x128xf32> -> vector<8x128xf32>
    %c0_9 = arith.constant 0 : index
    %c0_10 = arith.constant 0 : index
    %c0_11 = arith.constant 0 : index
    %10 = vector.load %arg5[%c0_9, %c0_10, %c0_11] : memref<1x1x128xf32, #tpu.memory_space<vmem>>, vector<1x1x128xf32>
    %11 = vector.shape_cast %10 : vector<1x1x128xf32> to vector<1x128xf32>
    %12 = vector.broadcast %11 : vector<1x128xf32> to vector<8x128xf32>
    %13 = arith.addf %9, %12 : vector<8x128xf32>
    %14 = arith.negf %13 : vector<8x128xf32>
    %15 = math.exp %14 : vector<8x128xf32>
    %cst_12 = arith.constant 1.000000e+00 : f32
    %16 = vector.broadcast %cst_12 : f32 to vector<8x128xf32>
    %17 = arith.addf %16, %15 : vector<8x128xf32>
    %18 = arith.divf %16, %17 : vector<8x128xf32>
    %19 = math.tanh %13 : vector<8x128xf32>
    %20 = tpu.iota {dimensions = array<i32: 1>} : vector<8x128xi32>
    %c64_i32 = arith.constant 64 : i32
    %21 = vector.broadcast %c64_i32 : i32 to vector<8x128xi32>
    %22 = arith.cmpi sge, %20, %21 : vector<8x128xi32>
    %c96_i32 = arith.constant 96 : i32
    %23 = vector.broadcast %c96_i32 : i32 to vector<8x128xi32>
    %24 = arith.cmpi slt, %20, %23 : vector<8x128xi32>
    %25 = arith.andi %22, %24 : vector<8x128xi1>
    %26 = arith.select %25, %19, %18 : vector<8x128xi1>, vector<8x128xf32>
    %27 = vector.extract_strided_slice %26 {offsets = [0, 0], sizes = [8, 32], strides = [1, 1]} : vector<8x128xf32> to vector<8x32xf32>
    %28 = vector.extract_strided_slice %26 {offsets = [0, 32], sizes = [8, 32], strides = [1, 1]} : vector<8x128xf32> to vector<8x32xf32>
    %29 = vector.extract_strided_slice %26 {offsets = [0, 64], sizes = [8, 32], strides = [1, 1]} : vector<8x128xf32> to vector<8x32xf32>
    %30 = vector.extract_strided_slice %26 {offsets = [0, 96], sizes = [8, 32], strides = [1, 1]} : vector<8x128xf32> to vector<8x32xf32>
    %c0_13 = arith.constant 0 : index
    %c0_14 = arith.constant 0 : index
    %c0_15 = arith.constant 0 : index
    %31 = vector.load %arg3[%c0_13, %c0_14, %c0_15] : memref<1x8x32xf32, #tpu.memory_space<vmem>>, vector<1x8x32xf32>
    %32 = vector.shape_cast %31 : vector<1x8x32xf32> to vector<8x32xf32>
    %33 = arith.mulf %28, %32 : vector<8x32xf32>
    %34 = arith.mulf %27, %29 : vector<8x32xf32>
    %35 = arith.addf %33, %34 : vector<8x32xf32>
    %36 = math.tanh %35 : vector<8x32xf32>
    %37 = arith.mulf %30, %36 : vector<8x32xf32>
    %38 = tpu.concatenate %37, %35 in 1 : vector<8x32xf32>, vector<8x32xf32> -> vector<8x64xf32>
    %c0_16 = arith.constant 0 : index
    %c0_17 = arith.constant 0 : index
    %c0_18 = arith.constant 0 : index
    %39 = vector.load %arg6[%c0_16, %c0_17, %c0_18] : memref<1x8x64xf32, #tpu.memory_space<vmem>>, vector<1x8x64xf32>
    %40 = vector.shape_cast %39 : vector<1x8x64xf32> to vector<8x64xf32>
    %41 = vector.shape_cast %38 : vector<8x64xf32> to vector<1x8x64xf32>
    tpu.vector_store %arg6[%c0_16, %c0_17, %c0_18], %41 {strides = array<i32>} : memref<1x8x64xf32, #tpu.memory_space<vmem>>, vector<1x8x64xf32>,
    %c1_i32 = arith.constant 1 : i32
    %42 = arith.cmpi slt, %arg0, %c1_i32 : i32
    %43 = arith.extui %42 : i1 to i32
    %c0_i32_19 = arith.constant 0 : i32
    %44 = arith.cmpi ne, %43, %c0_i32_19 : i32
    scf.if %44 {
      %c0_20 = arith.constant 0 : index
      %c0_21 = arith.constant 0 : index
      %45 = vector.load %arg7[%c0_20, %c0_21] : memref<8x64xf32, #tpu.memory_space<vmem>>, vector<8x32xf32>
      tpu.vector_store %arg7[%c0_20, %c0_21], %37 {strides = array<i32>} : memref<8x64xf32, #tpu.memory_space<vmem>>, vector<8x32xf32>,
    } else {
    }
    return
  }
  func.func @transform_0(%arg0: i32) -> (i32, i32) {
    %c0_i32 = arith.constant 0 : i32
    %c0_i32_0 = arith.constant 0 : i32
    %c0_i32_1 = arith.constant 0 : i32
    return %c0_i32, %c0_i32_0 : i32, i32
  }
  func.func @transform_1(%arg0: i32) -> (i32, i32, i32) {
    %c0_i32 = arith.constant 0 : i32
    %c0_i32_0 = arith.constant 0 : i32
    %c0_i32_1 = arith.constant 0 : i32
    return %arg0, %c0_i32, %c0_i32_0 : i32, i32, i32
  }
  func.func @transform_2(%arg0: i32) -> (i32, i32, i32) {
    %c0_i32 = arith.constant 0 : i32
    %c0_i32_0 = arith.constant 0 : i32
    %c0_i32_1 = arith.constant 0 : i32
    return %arg0, %c0_i32, %c0_i32_0 : i32, i32, i32
  }
  func.func @transform_3(%arg0: i32) -> (i32, i32, i32) {
    %c0_i32 = arith.constant 0 : i32
    %c0_i32_0 = arith.constant 0 : i32
    %c0_i32_1 = arith.constant 0 : i32
    return %arg0, %c0_i32, %c0_i32_0 : i32, i32, i32
  }
  func.func @transform_4(%arg0: i32) -> (i32, i32, i32) {
    %c0_i32 = arith.constant 0 : i32
    %c0_i32_0 = arith.constant 0 : i32
    %c0_i32_1 = arith.constant 0 : i32
    return %arg0, %c0_i32, %c0_i32_0 : i32, i32, i32
  }
  func.func @transform_5(%arg0: i32) -> (i32, i32, i32) {
    %c0_i32 = arith.constant 0 : i32
    %c0_i32_0 = arith.constant 0 : i32
    %c0_i32_1 = arith.constant 0 : i32
    return %arg0, %c0_i32, %c0_i32_0 : i32, i32, i32
  }
}

</mosaic_0001>

<llo_original>
// kernel: tpu_custom_call.1
$region0: #{tpu_custom_call.1}
  #allocation0 [shape = 'u32[]', space=smem, size = 0x4, offset = 0x4, fixed_abs, tag = 'smem constant byte address 0x4 - core index']
  #allocation1 [shape = 'u32[144,128]{1,0:T(1,128)}', space=vmem, size = 0x12000, scoped, tag = 'internal scratch']
  #allocation2 [shape = 'f32[8,64]{1,0:T(8,128)}', space=vmem, size = 0x1000, scoped, tag = 'scratch operand']
  %s0 = inlined_call_operand.hbm [shape: f32[8,32], index: 0, kind: input, shape index: {}]
  %s1 = inlined_call_operand.hbm [shape: f32[2,8,32], index: 1, kind: input, shape index: {}]
  %s2 = inlined_call_operand.hbm [shape: f32[2,8,32], index: 2, kind: input, shape index: {}]
  %s3 = inlined_call_operand.hbm [shape: f32[2,64,128], index: 3, kind: input, shape index: {}]
  %s4 = inlined_call_operand.vmem [shape: f32[2,1,128], index: 4, kind: input, shape index: {}]
  %s5 = inlined_call_operand.hbm [shape: f32[2,8,64], index: 5, kind: output, shape index: {}]
  %s6 = sld [smem:[#allocation0]]
  $region77: #{tpu_custom_call.1} parent=0
    _
  %s8 = ssub.s32 1, %s6
  %s9 = scalar_select 0, %s8, %s6
  $region1: #{tpu_custom_call.1} parent=0
    #allocation3 [shape = 'u8[4096]{0}', space=vmem, size = 0x1000, scoped, tag = 'input window, operand 0, single buffered']
    #allocation4 [shape = 's32[2]{0}', space=sflag, size = 0x8, scoped, tag = 'scoped memory for tpu_custom_call.1']
    #allocation5 [shape = 's32[2]{0}', space=sflag, size = 0x8, scoped, tag = 'scoped memory for tpu_custom_call.1']
    #allocation6 [shape = 'u8[8192]{0}', space=vmem, size = 0x2000, scoped, tag = 'input window, operand 1']
    #allocation7 [shape = 's32[2]{0}', space=sflag, size = 0x8, scoped, tag = 'scoped memory for tpu_custom_call.1']
    #allocation8 [shape = 'u8[8192]{0}', space=vmem, size = 0x2000, scoped, tag = 'input window, operand 2']
    #allocation9 [shape = 'u8[65536]{0}', space=vmem, size = 0x10000, scoped, tag = 'input window, operand 3']
    #allocation10 [shape = 's32[2]{0}', space=sflag, size = 0x8, scoped, tag = 'scoped memory for tpu_custom_call.1']
    #allocation11 [shape = 'u8[8192]{0}', space=vmem, size = 0x2000, scoped, tag = 'output window, operand 0']
    %10 = vsyncpa [#allocation4], 0
    %11 = vsyncpa [#allocation7], 0
    %s12 = scalar_lea.sflag [#allocation7], 1
    %13 = vsyncpa %s12, 0
    %14 = vsyncpa [#allocation10], 0
    %s15 = scalar_lea.sflag [#allocation10], 1
    %16 = vsyncpa %s15, 0
    %17 = vsyncpa [#allocation5], 0
    %s18 = scalar_lea.sflag [#allocation5], 1
    %19 = vsyncpa %s18, 0
    loop: start=0, step=1, limit=4
    $region2: #{tpu_custom_call.1} parent=1 // loop_pre_header
      _
    $region3: #{tpu_custom_call.1} parent=1 // loop_header
      %s21 = sphi 0, %s25
      %p22 = scmp.ge.s32.totalorder %s21, 4
      %s29 = sphi 0, %s29
      %s31 = sphi 0, %s29
      %s32 = sphi 0, %s31
      %s46 = sphi 0, %s32
      %s52 = sphi 0, %s54
      %s55 = sphi 0, %s52
      %s56 = sphi 0, %s55
      %s72 = sphi 0, %s56
      %s78 = sphi 0, %s80
      %s81 = sphi 0, %s78
      %s82 = sphi 0, %s81
      %s98 = sphi 0, %s82
      %s104 = sphi 0, %s106
      %s107 = sphi 0, %s104
      %s108 = sphi 0, %s107
      %s124 = sphi 0, %s108
      %s130 = sphi 0, %s132
      %s133 = sphi 0, %s130
      %s134 = sphi 0, %s133
      %s150 = sphi 0, %s134
      %s156 = sphi 0, %s158
      %s159 = sphi 0, %s156
      %s160 = sphi 0, %s159
      %s176 = sphi 0, %s160
    $region4: #{tpu_custom_call.1} parent=1 // loop_header_branch
      %24 = sbr.rel (%p22) target = $region8
    $region5: #{tpu_custom_call.1} parent=1 // loop_body
      %s26 = ssub.s32 %s21, 1
      %s27 = ssub.s32 %s21, 2
      %s28 = sadd.s32 %s21, 1
      %s30 = sadd.s32 %s29, 1
      %p33 = scmp.eq.s32.totalorder %s21, 1
      %p34 = scmp.ne.s32.totalorder %s29, %s31
      %p35 = scmp.eq.s32.totalorder %s21, 0
      %p36 = por %p34, %p35
      %p37 = scmp.ne.s32.totalorder %s29, %s31
      %p38 = scmp.eq.s32.totalorder %s26, 1
      %p39 = por %p37, %p38
      %p40 = scmp.ne.s32.totalorder %s31, %s32
      %p41 = scmp.eq.s32.totalorder %s26, 0
      %p42 = por %p40, %p41
      %p43 = scmp.ne.s32.totalorder %s31, %s32
      %p44 = scmp.eq.s32.totalorder %s27, 1
      %p45 = por %p43, %p44
      %p47 = scmp.ne.s32.totalorder %s32, %s46
      %p48 = scmp.eq.s32.totalorder %s27, 0
      %p49 = por %p47, %p48
      %s50 = ssub.s32 %s21, %s28
      %p51 = scmp.eq.s32.totalorder %s50, 0
      %s53 = sadd.s32 %s52, 1
      %s54 = scalar_select %p51, %s52, %s53
      %p57 = pneg %p51
      %p58 = scmp.eq.s32.totalorder %s21, 1
      %p59 = por %p57, %p58
      %p60 = scmp.ne.s32.totalorder %s52, %s55
      %p61 = scmp.eq.s32.totalorder %s21, 0
      %p62 = por %p60, %p61
      %p63 = scmp.ne.s32.totalorder %s52, %s55
      %p64 = scmp.eq.s32.totalorder %s26, 1
      %p65 = por %p63, %p64
      %p66 = scmp.ne.s32.totalorder %s55, %s56
      %p67 = scmp.eq.s32.totalorder %s26, 0
      %p68 = por %p66, %p67
      %p69 = scmp.ne.s32.totalorder %s55, %s56
      %p70 = scmp.eq.s32.totalorder %s27, 1
      %p71 = por %p69, %p70
      %p73 = scmp.ne.s32.totalorder %s56, %s72
      %p74 = scmp.eq.s32.totalorder %s27, 0
      %p75 = por %p73, %p74
      %s76 = ssub.s32 %s21, %s28
      %p77 = scmp.eq.s32.totalorder %s76, 0
      %s79 = sadd.s32 %s78, 1
      %s80 = scalar_select %p77, %s78, %s79
      %p83 = pneg %p77
      %p84 = scmp.eq.s32.totalorder %s21, 1
      %p85 = por %p83, %p84
      %p86 = scmp.ne.s32.totalorder %s78, %s81
      %p87 = scmp.eq.s32.totalorder %s21, 0
      %p88 = por %p86, %p87
      %p89 = scmp.ne.s32.totalorder %s78, %s81
      %p90 = scmp.eq.s32.totalorder %s26, 1
      %p91 = por %p89, %p90
      %p92 = scmp.ne.s32.totalorder %s81, %s82
      %p93 = scmp.eq.s32.totalorder %s26, 0
      %p94 = por %p92, %p93
      %p95 = scmp.ne.s32.totalorder %s81, %s82
      %p96 = scmp.eq.s32.totalorder %s27, 1
      %p97 = por %p95, %p96
      %p99 = scmp.ne.s32.totalorder %s82, %s98
      %p100 = scmp.eq.s32.totalorder %s27, 0
      %p101 = por %p99, %p100
      %s102 = ssub.s32 %s21, %s28
      %p103 = scmp.eq.s32.totalorder %s102, 0
      %s105 = sadd.s32 %s104, 1
      %s106 = scalar_select %p103, %s104, %s105
      %p109 = pneg %p103
      %p110 = scmp.eq.s32.totalorder %s21, 1
      %p111 = por %p109, %p110
      %p112 = scmp.ne.s32.totalorder %s104, %s107
      %p113 = scmp.eq.s32.totalorder %s21, 0
      %p114 = por %p112, %p113
      %p115 = scmp.ne.s32.totalorder %s104, %s107
      %p116 = scmp.eq.s32.totalorder %s26, 1
      %p117 = por %p115, %p116
      %p118 = scmp.ne.s32.totalorder %s107, %s108
      %p119 = scmp.eq.s32.totalorder %s26, 0
      %p120 = por %p118, %p119
      %p121 = scmp.ne.s32.totalorder %s107, %s108
      %p122 = scmp.eq.s32.totalorder %s27, 1
      %p123 = por %p121, %p122
      %p125 = scmp.ne.s32.totalorder %s108, %s124
      %p126 = scmp.eq.s32.totalorder %s27, 0
      %p127 = por %p125, %p126
      %s128 = ssub.s32 %s21, %s28
      %p129 = scmp.eq.s32.totalorder %s128, 0
      %s131 = sadd.s32 %s130, 1
      %s132 = scalar_select %p129, %s130, %s131
      %p135 = pneg %p129
      %p136 = scmp.eq.s32.totalorder %s21, 1
      %p137 = por %p135, %p136
      %p138 = scmp.ne.s32.totalorder %s130, %s133
      %p139 = scmp.eq.s32.totalorder %s21, 0
      %p140 = por %p138, %p139
      %p141 = scmp.ne.s32.totalorder %s130, %s133
      %p142 = scmp.eq.s32.totalorder %s26, 1
      %p143 = por %p141, %p142
      %p144 = scmp.ne.s32.totalorder %s133, %s134
      %p145 = scmp.eq.s32.totalorder %s26, 0
      %p146 = por %p144, %p145
      %p147 = scmp.ne.s32.totalorder %s133, %s134
      %p148 = scmp.eq.s32.totalorder %s27, 1
      %p149 = por %p147, %p148
      %p151 = scmp.ne.s32.totalorder %s134, %s150
      %p152 = scmp.eq.s32.totalorder %s27, 0
      %p153 = por %p151, %p152
      %s154 = ssub.s32 %s21, %s28
      %p155 = scmp.eq.s32.totalorder %s154, 0
      %s157 = sadd.s32 %s156, 1
      %s158 = scalar_select %p155, %s156, %s157
      %p161 = pneg %p155
      %p162 = scmp.eq.s32.totalorder %s21, 1
      %p163 = por %p161, %p162
      %p164 = scmp.ne.s32.totalorder %s156, %s159
      %p165 = scmp.eq.s32.totalorder %s21, 0
      %p166 = por %p164, %p165
      %p167 = scmp.ne.s32.totalorder %s156, %s159
      %p168 = scmp.eq.s32.totalorder %s26, 1
      %p169 = por %p167, %p168
      %p170 = scmp.ne.s32.totalorder %s159, %s160
      %p171 = scmp.eq.s32.totalorder %s26, 0
      %p172 = por %p170, %p171
      %p173 = scmp.ne.s32.totalorder %s159, %s160
      %p174 = scmp.eq.s32.totalorder %s27, 1
      %p175 = por %p173, %p174
      %p177 = scmp.ne.s32.totalorder %s160, %s176
      %p178 = scmp.eq.s32.totalorder %s27, 0
      %p179 = por %p177, %p178
      %p180 = scmp.le.s32.totalorder 1, %s21
      %p181 = scmp.lt.s32.totalorder %s21, 3
      %p182 = pnand %p180, %p181
      %p183 = pneg %p182
      // Predicated region
      $region9: #{tpu_custom_call.1} parent=5 // pred_check
        _
      $region10: #{tpu_custom_call.1} parent=5 // pred_check_branch
        %185 = sbr.rel (%p182) target = $region12
      $region11: #{tpu_custom_call.1} parent=5 // pred_region
        %s186 = ssub.s32 %s21, 1
        // Predicated region
        $region13: #{tpu_custom_call.1} parent=11 // pred_check
          %p187 = pneg %p42
        $region14: #{tpu_custom_call.1} parent=11 // pred_check_branch
          %189 = sbr.rel (%p187) target = $region16
        $region15: #{tpu_custom_call.1} parent=11 // pred_region
          %s191 = ssub.s32 128, 128
          %192 = vsyncadd [#allocation4], %s191
          %s194 = sshll.u32 [#allocation3], 4
          %s195 = int_to_ptr.vmem [resolvable:$true] %s194
          %197 = dma.hbm_to_vmem [thread:$0]  %s0, 128, %s195, [#allocation4]
        $region16: #{tpu_custom_call.1} parent=11 // pred_fallthru
          _
      $region12: #{tpu_custom_call.1} parent=5 // pred_fallthru
        _
      %p198 = scmp.lt.s32.totalorder %s21, 2
      // Predicated region
      $region17: #{tpu_custom_call.1} parent=5 // pred_check
        %p199 = pneg %p198
      $region18: #{tpu_custom_call.1} parent=5 // pred_check_branch
        %201 = sbr.rel (%p199) target = $region20
      $region19: #{tpu_custom_call.1} parent=5 // pred_region
        // Predicated region
        $region21: #{tpu_custom_call.1} parent=19 // pred_check
          %p202 = pneg %p62
        $region22: #{tpu_custom_call.1} parent=19 // pred_check_branch
          %204 = sbr.rel (%p202) target = $region24
        $region23: #{tpu_custom_call.1} parent=19 // pred_region
          %s205 = sand.u32 %s21, 1
          %s206 = scalar_lea.sflag [#allocation7], %s205
          %s207 = sand.u32 %s52, 1
          %s208 = smul.addr %s207, 8
          %s209 = scalar_lea.vmem [#allocation6], %s208
          %s211 = ssub.s32 128, 128
          %212 = vsyncadd %s206, %s211
          %s213 = smul.addr %s21, 128
          %s214 = scalar_lea.hbm %s1, %s213
          %s216 = sshll.u32 %s209, 4
          %s217 = int_to_ptr.vmem [resolvable:$true] %s216
          %219 = dma.hbm_to_vmem [thread:$0]  %s214, 128, %s217, %s206
        $region24: #{tpu_custom_call.1} parent=19 // pred_fallthru
          _
        // Predicated region
        $region25: #{tpu_custom_call.1} parent=19 // pred_check
          %p220 = pneg %p88
        $region26: #{tpu_custom_call.1} parent=19 // pred_check_branch
          %222 = sbr.rel (%p220) target = $region28
        $region27: #{tpu_custom_call.1} parent=19 // pred_region
          %s223 = sand.u32 %s21, 1
          %s224 = scalar_lea.sflag [#allocation7], %s223
          %s225 = sand.u32 %s78, 1
          %s226 = smul.addr %s225, 8
          %s227 = scalar_lea.vmem [#allocation8], %s226
          %s229 = ssub.s32 128, 128
          %230 = vsyncadd %s224, %s229
          %s231 = smul.addr %s21, 128
          %s232 = scalar_lea.hbm %s2, %s231
          %s234 = sshll.u32 %s227, 4
          %s235 = int_to_ptr.vmem [resolvable:$true] %s234
          %237 = dma.hbm_to_vmem [thread:$0]  %s232, 128, %s235, %s224
        $region28: #{tpu_custom_call.1} parent=19 // pred_fallthru
          _
        // Predicated region
        $region29: #{tpu_custom_call.1} parent=19 // pred_check
          %p238 = pneg %p114
        $region30: #{tpu_custom_call.1} parent=19 // pred_check_branch
          %240 = sbr.rel (%p238) target = $region32
        $region31: #{tpu_custom_call.1} parent=19 // pred_region
          %s241 = sand.u32 %s104, 1
          %s242 = scalar_lea.sflag [#allocation10], %s241
          %s243 = sand.u32 %s104, 1
          %s244 = smul.addr %s243, 64
          %s245 = scalar_lea.vmem [#allocation9], %s244
          %s247 = ssub.s32 1024, 1024
          %248 = vsyncadd %s242, %s247
          %s249 = smul.addr %s21, 8
          %s250 = smul.addr %s249, 128
          %s251 = scalar_lea.hbm %s3, %s250
          %s252 = sshll.u32 %s245, 4
          %s253 = int_to_ptr.vmem [resolvable:$true] %s252
          %258 = dma.hbm_to_vmem [thread:$0]  %s251, 1024, %s253, %s242, 128, 128, 8
        $region32: #{tpu_custom_call.1} parent=19 // pred_fallthru
          _
        // Predicated region
        $region33: #{tpu_custom_call.1} parent=19 // pred_check
          %p259 = pneg %p140
        $region34: #{tpu_custom_call.1} parent=19 // pred_check_branch
          %261 = sbr.rel (%p259) target = $region36
        $region35: #{tpu_custom_call.1} parent=19 // pred_region
          %p262 = scmp.lt.s32.totalorder %s21, 1
          %s263 = scalar_select %p262, %s21, 1
          %s264 = scalar_lea.vmem %s4, %s263
        $region36: #{tpu_custom_call.1} parent=19 // pred_fallthru
          _
      $region20: #{tpu_custom_call.1} parent=5 // pred_fallthru
        _
      %p265 = scmp.le.s32.totalorder 1, %s21
      %p266 = scmp.lt.s32.totalorder %s21, 3
      %p267 = pnand %p265, %p266
      %p268 = pneg %p267
      // Predicated region
      $region37: #{tpu_custom_call.1} parent=5 // pred_check
        _
      $region38: #{tpu_custom_call.1} parent=5 // pred_check_branch
        %270 = sbr.rel (%p267) target = $region40
      $region39: #{tpu_custom_call.1} parent=5 // pred_region
        %s271 = ssub.s32 %s21, 1
        // Predicated region
        $region41: #{tpu_custom_call.1} parent=39 // pred_check
          %p272 = pneg %p42
        $region42: #{tpu_custom_call.1} parent=39 // pred_check_branch
          %274 = sbr.rel (%p272) target = $region44
        $region43: #{tpu_custom_call.1} parent=39 // pred_region
          %275 = dma.done [#allocation4], 128
        $region44: #{tpu_custom_call.1} parent=39 // pred_fallthru
          _
        %s276 = sand.u32 %s26, 1
        %s277 = scalar_lea.sflag [#allocation7], %s276
        %s278 = sand.u32 %s55, 1
        %s279 = smul.addr %s278, 8
        %s280 = scalar_lea.vmem [#allocation6], %s279
        // Predicated region
        $region45: #{tpu_custom_call.1} parent=39 // pred_check
          %p281 = pneg %p68
        $region46: #{tpu_custom_call.1} parent=39 // pred_check_branch
          %283 = sbr.rel (%p281) target = $region48
        $region47: #{tpu_custom_call.1} parent=39 // pred_region
          %284 = dma.done %s277, 128
        $region48: #{tpu_custom_call.1} parent=39 // pred_fallthru
          _
        %s285 = sand.u32 %s26, 1
        %s286 = scalar_lea.sflag [#allocation7], %s285
        %s287 = sand.u32 %s81, 1
        %s288 = smul.addr %s287, 8
        %s289 = scalar_lea.vmem [#allocation8], %s288
        // Predicated region
        $region49: #{tpu_custom_call.1} parent=39 // pred_check
          %p290 = pneg %p94
        $region50: #{tpu_custom_call.1} parent=39 // pred_check_branch
          %292 = sbr.rel (%p290) target = $region52
        $region51: #{tpu_custom_call.1} parent=39 // pred_region
          %293 = dma.done %s286, 128
        $region52: #{tpu_custom_call.1} parent=39 // pred_fallthru
          _
        %s294 = sand.u32 %s107, 1
        %s295 = scalar_lea.sflag [#allocation10], %s294
        %s296 = sand.u32 %s107, 1
        %s297 = smul.addr %s296, 64
        %s298 = scalar_lea.vmem [#allocation9], %s297
        // Predicated region
        $region53: #{tpu_custom_call.1} parent=39 // pred_check
          %p299 = pneg %p120
        $region54: #{tpu_custom_call.1} parent=39 // pred_check_branch
          %301 = sbr.rel (%p299) target = $region56
        $region55: #{tpu_custom_call.1} parent=39 // pred_region
          %302 = dma.done %s295, 1024
        $region56: #{tpu_custom_call.1} parent=39 // pred_fallthru
          _
        %p303 = pneg %p42
        %p304 = pneg %p39
        %s305 = sand.u32 %s26, 1
        %s306 = scalar_lea.sflag [#allocation7], %s305
        %s307 = sand.u32 %s55, 1
        %s308 = smul.addr %s307, 8
        %s309 = scalar_lea.vmem [#allocation6], %s308
        %p310 = pneg %p68
        %p311 = pneg %p65
        %s312 = sand.u32 %s26, 1
        %s313 = scalar_lea.sflag [#allocation7], %s312
        %s314 = sand.u32 %s81, 1
        %s315 = smul.addr %s314, 8
        %s316 = scalar_lea.vmem [#allocation8], %s315
        %p317 = pneg %p94
        %p318 = pneg %p91
        %s319 = sand.u32 %s107, 1
        %s320 = scalar_lea.sflag [#allocation10], %s319
        %s321 = sand.u32 %s107, 1
        %s322 = smul.addr %s321, 64
        %s323 = scalar_lea.vmem [#allocation9], %s322
        %p324 = pneg %p120
        %p325 = pneg %p117
        %p326 = scmp.lt.s32.totalorder %s26, 1
        %s327 = scalar_select %p326, %s26, 1
        %s328 = scalar_lea.vmem %s4, %s327
        %p329 = pneg %p146
        %p330 = pneg %p143
        %p331 = pneg %p172
        %p332 = pneg %p169
        %s333 = sand.u32 %s159, 1
        %s334 = scalar_lea.sflag [#allocation5], %s333
        %s335 = sand.u32 %s159, 1
        %s336 = smul.addr %s335, 8
        %s337 = scalar_lea.vmem [#allocation11], %s336
        %p338 = scmp.lt.s32.totalorder %s26, 1
        %s339 = scalar_select %p338, %s26, 1
        %s340 = scalar_lea.vmem %s4, %s339
        %p341 = scmp.eq.s32.totalorder %s26, 0
        // Predicated region
        $region57: #{tpu_custom_call.1} parent=39 // pred_check
          %p342 = pneg %p341
        $region58: #{tpu_custom_call.1} parent=39 // pred_check_branch
          %344 = sbr.rel (%p342) target = $region60
        $region59: #{tpu_custom_call.1} parent=39 // pred_region
          %v345 = vld [vmem:[#allocation3] sm:$0xff]
          %vm346 = vcmask 261120
          %347 = vst.msk [vmem:[#allocation2] sm:$0xff] %vm346, %v345
        $region60: #{tpu_custom_call.1} parent=39 // pred_fallthru
          _
        %v348 = vld [vmem:[%s280] sm:$0xff]
        %350 = vrot.lane.b32.xlu0 %v348, 32
        %v351 = vpop.permute.xlu0 %350
        %vm353 = vcmask 523520
        %354 = vst.msk [vmem:[#allocation2] sm:$0xff] %vm353, %v351
        %v355 = vld [vmem:[#allocation2] sm:$0xff]
        %v356 = vld [vmem:[%s298] sm:$0xff]
        %v357 = vld [vmem:[%s298 + $0x8] sm:$0xff]
        %v358 = vld [vmem:[%s298 + $0x10] sm:$0xff]
        %v359 = vld [vmem:[%s298 + $0x18] sm:$0xff]
        %v360 = vld [vmem:[%s298 + $0x20] sm:$0xff]
        %v361 = vld [vmem:[%s298 + $0x28] sm:$0xff]
        %v362 = vld [vmem:[%s298 + $0x30] sm:$0xff]
        %v363 = vld [vmem:[%s298 + $0x38] sm:$0xff]
        %v364 = vld [vmem:[%s340] sm:$0x1]
        %v366 = vlaneseq
        %v367 = vshrl.u32 %v366, 7
        %v368 = vsub.s32 0, %v367
        %v369 = vrot.slane %v364, %v368
        %vm371 = vcmask 523264
        %v373 = vsel %vm371, %v355, 0
        %375 = vmatprep.subr.mxu0 0.0
        %376 = vmatpush1.msra.mxu0 0.0
        %377 = vmatprep.subr.mxu0 0.0
        %378 = vmatpush1.msra.mxu0 0.0
        %379 = vmatprep.subr.mxu0 0.0
        %380 = vmatpush1.msra.mxu0 0.0
        %381 = vmatprep.subr.mxu0 0.0
        %382 = vmatpush1.msra.mxu0 0.0
        %383 = vmatprep.subr.mxu0 0.0
        %384 = vmatpush1.msra.mxu0 0.0
        %385 = vmatprep.subr.mxu0 0.0
        %386 = vmatpush1.msra.mxu0 0.0
        %387 = vmatprep.subr.mxu0 0.0
        %388 = vmatpush1.msra.mxu0 0.0
        %389 = vmatprep.subr.mxu0 0.0
        %390 = vmatpush1.msra.mxu0 0.0
        %391 = vmatprep.subr.mxu0 0.0
        %392 = vmatpush1.msra.mxu0 %v363
        %393 = vmatprep.subr.mxu0 0.0
        %394 = vmatpush1.msra.mxu0 %v362
        %395 = vmatprep.subr.mxu0 0.0
        %396 = vmatpush1.msra.mxu0 %v361
        %397 = vmatprep.subr.mxu0 0.0
        %398 = vmatpush1.msra.mxu0 %v360
        %399 = vmatprep.subr.mxu0 0.0
        %400 = vmatpush1.msra.mxu0 %v359
        %401 = vmatprep.subr.mxu0 0.0
        %402 = vmatpush1.msra.mxu0 %v358
        %403 = vmatprep.subr.mxu0 0.0
        %404 = vmatpush1.msra.mxu0 %v357
        %405 = vmatprep.subr.mxu0 0.0
        %406 = vmatpush1.msra.mxu0 %v356
        %407 = vmatprep.subr.mxu0 0.0
        %408 = vmatpush2.msra.mxu0 0.0
        %409 = vmatprep.subr.mxu0 0.0
        %410 = vmatpush2.msra.mxu0 0.0
        %411 = vmatprep.subr.mxu0 0.0
        %412 = vmatpush2.msra.mxu0 0.0
        %413 = vmatprep.subr.mxu0 0.0
        %414 = vmatpush2.msra.mxu0 0.0
        %415 = vmatprep.subr.mxu0 0.0
        %416 = vmatpush2.msra.mxu0 0.0
        %417 = vmatprep.subr.mxu0 0.0
        %418 = vmatpush2.msra.mxu0 0.0
        %419 = vmatprep.subr.mxu0 0.0
        %420 = vmatpush2.msra.mxu0 0.0
        %421 = vmatprep.subr.mxu0 0.0
        %422 = vmatpush2.msra.mxu0 0.0
        %423 = vmatprep.subr.mxu0 0.0
        %424 = vmatpush2.msra.mxu0 0.0
        %425 = vmatprep.subr.mxu0 0.0
        %426 = vmatpush2.msra.mxu0 0.0
        %427 = vmatprep.subr.mxu0 0.0
        %428 = vmatpush2.msra.mxu0 0.0
        %429 = vmatprep.subr.mxu0 0.0
        %430 = vmatpush2.msra.mxu0 0.0
        %431 = vmatprep.subr.mxu0 0.0
        %432 = vmatpush2.msra.mxu0 0.0
        %433 = vmatprep.subr.mxu0 0.0
        %434 = vmatpush2.msra.mxu0 0.0
        %435 = vmatprep.subr.mxu0 0.0
        %436 = vmatpush2.msra.mxu0 0.0
        %437 = vmatprep.subr.mxu0 0.0
        %438 = vmatpush2.msra.mxu0 0.0
        %439 = vmatprep.mubr.f32.mxu0 0.0
        %440 = vmatmul.mubr.f32.gmra.mxu0 %v373
        %v441 = vpop.f32.mrf.mxu0
        %v442 = vadd.f32 %v369, %v441
        %v443 = vpop.f32.mrf.mxu0
        %444 = vdwg.mxu0
        %v445 = vxor.u32 %v442, 2147483648
        %v446 = vmul.f32 %v445, 1.442695
        %v447 = vpow.pop %v446
        %v448 = vadd.f32 %v447, 1.0
        %v449 = vrcp.pop %v448
        %v450 = vmul.f32 1.0, %v449
        %v451 = vtanh.pop %v442
        %v452 = vlaneseq
        %v453 = vand.u32 %v452, 127
        %vm454 = vcmp.ge.s32.totalorder %v453, 64
        %vm455 = vcmp.lt.s32.totalorder %v453, 96
        %vm456 = vmand %vm454, %vm455
        %v457 = vsel %vm456, %v451, %v450
        %v458 = vld [vmem:[%s289] sm:$0xff]
        %460 = vrot.lane.b32.xlu0 %v458, 32
        %v461 = vpop.permute.xlu0 %460
        %v463 = vmul.f32 %v457, %v461
        %465 = vrot.lane.b32.xlu0 %v457, 64
        %v466 = vpop.permute.xlu0 %465
        %v468 = vmul.f32 %v457, %v466
        %470 = vrot.lane.b32.xlu0 %v468, 32
        %v471 = vpop.permute.xlu0 %470
        %v473 = vadd.f32 %v463, %v471
        %v474 = vtanh.pop %v473
        %476 = vrot.lane.b32.xlu0 %v474, 64
        %v477 = vpop.permute.xlu0 %476
        %v479 = vmul.f32 %v457, %v477
        %481 = vrot.lane.b32.xlu0 %v479, 32
        %v482 = vpop.permute.xlu0 %481
        %vm484 = vcmask 261120
        %v485 = vsel %vm484, %v482, %v473
        %486 = vst.msk [vmem:[%s337] sm:$0xff] %vm371, %v485
        %p487 = scmp.lt.s32.totalorder %s26, 1
        // Predicated region
        $region61: #{tpu_custom_call.1} parent=39 // pred_check
          %p488 = pneg %p487
        $region62: #{tpu_custom_call.1} parent=39 // pred_check_branch
          %490 = sbr.rel (%p488) target = $region64
        $region63: #{tpu_custom_call.1} parent=39 // pred_region
          %491 = vst.msk [vmem:[#allocation2] sm:$0xff] %vm484, %v482
        $region64: #{tpu_custom_call.1} parent=39 // pred_fallthru
          _
        %s492 = sand.u32 %s159, 1
        %s493 = scalar_lea.sflag [#allocation5], %s492
        %s494 = sand.u32 %s159, 1
        %s495 = smul.addr %s494, 8
        %s496 = scalar_lea.vmem [#allocation11], %s495
        // Predicated region
        $region65: #{tpu_custom_call.1} parent=39 // pred_check
          %p497 = pneg %p169
        $region66: #{tpu_custom_call.1} parent=39 // pred_check_branch
          %499 = sbr.rel (%p497) target = $region68
        $region67: #{tpu_custom_call.1} parent=39 // pred_region
          %s501 = ssub.s32 128, 128
          %502 = vsyncadd %s493, %s501
          %s503 = smul.addr %s26, 128
          %s504 = scalar_lea.hbm %s5, %s503
          %s506 = sshll.u32 %s496, 4
          %s507 = int_to_ptr.vmem [resolvable:$true] %s506
          %509 = dma.vmem_to_hbm [thread:$0]  %s507, 128, %s504, %s493
        $region68: #{tpu_custom_call.1} parent=39 // pred_fallthru
          _
      $region40: #{tpu_custom_call.1} parent=5 // pred_fallthru
        _
      %p510 = scmp.le.s32.totalorder 2, %s21
      // Predicated region
      $region69: #{tpu_custom_call.1} parent=5 // pred_check
        %p511 = pneg %p510
      $region70: #{tpu_custom_call.1} parent=5 // pred_check_branch
        %513 = sbr.rel (%p511) target = $region72
      $region71: #{tpu_custom_call.1} parent=5 // pred_region
        %s514 = ssub.s32 %s21, 2
        // Predicated region
        $region73: #{tpu_custom_call.1} parent=71 // pred_check
          %p515 = pneg %p175
        $region74: #{tpu_custom_call.1} parent=71 // pred_check_branch
          %517 = sbr.rel (%p515) target = $region76
        $region75: #{tpu_custom_call.1} parent=71 // pred_region
          %s518 = sand.u32 %s160, 1
          %s519 = scalar_lea.sflag [#allocation5], %s518
          %s520 = sand.u32 %s160, 1
          %s521 = smul.addr %s520, 8
          %s522 = scalar_lea.vmem [#allocation11], %s521
          %523 = dma.done %s519, 128
        $region76: #{tpu_custom_call.1} parent=71 // pred_fallthru
          _
      $region72: #{tpu_custom_call.1} parent=5 // pred_fallthru
        _
    $region6: #{tpu_custom_call.1} parent=1 // loop_footer
      %s25 = sadd.s32 1, %s21
    $region7: #{tpu_custom_call.1} parent=1 // loop_footer_branch
      %20 = sbr.rel target = $region3
    $region8: #{tpu_custom_call.1} parent=1 // loop_exit
      _
    %524 = vsyncpa [#allocation4], 1
    %s525 = scalar_lea.sflag [#allocation4], 1
    %526 = vsyncpa %s525, 1
    %527 = vsyncpa [#allocation7], 1
    %s528 = scalar_lea.sflag [#allocation7], 1
    %529 = vsyncpa %s528, 1
    %530 = vsyncpa [#allocation10], 1
    %s531 = scalar_lea.sflag [#allocation10], 1
    %532 = vsyncpa %s531, 1
    %533 = vsyncpa [#allocation5], 1
    %s534 = scalar_lea.sflag [#allocation5], 1
    %535 = vsyncpa %s534, 1

</llo_original>
